<compile_context>
chip_gen: v6e
topology: v6e:2x2x1
jax: 0.10.0
libtpu: 0.0.40
codegen_flags: <defaults>
</compile_context>

<pallas_src>
from typing import NamedTuple

import numpy as np

import jax
import jax.numpy as jnp
from jax.experimental import pallas as pl
from jax.experimental.pallas import tpu as pltpu


def _round_up(x: int, m: int) -> int:
    return ((x + m - 1) // m) * m


class LinearTileConfig(NamedTuple):
    tm: int
    tn: int
    tk: int
    Bp: int
    Dp: int
    Cp: int


# Keep double-buffered tiles well under the 48 MiB scoped-VMEM limit
# (v7x physical VMEM is 64 MiB; leave headroom for compiler internal scratch).
_VMEM_TILE_BUDGET = 40 * 1024 * 1024
_VMEM_LIMIT_BYTES = 48 * 1024 * 1024


def _tile_bytes(tm: int, tn: int, tk: int) -> int:
    # f32: double-buffered x and W tiles + resident/double-buffered out tile + bias.
    return 4 * (2 * tm * tk + 2 * tk * tn + 2 * tm * tn + 2 * tn)


def choose_tiles(B: int, D: int, C: int) -> LinearTileConfig:
    # --- N (classes): pad only to the next multiple of 128, pick tn dividing Cp.
    Cp = _round_up(C, 128)
    if Cp <= 1024:
        tn = Cp                      # classifier head: N grid = 1, x read once
    elif Cp % 512 == 0:
        tn = 512
    elif Cp % 256 == 0:
        tn = 256
    else:
        tn = 128

    # --- M (batch): big tiles so W is re-read only Bp/tm times.
    Bp = _round_up(B, 8)
    tm = min(512, Bp)
    Bp = _round_up(Bp, tm)

    # --- K (features): prefer the full, un-padded reduction dim (no x/W K-pad,
    # single K step); fall back to a 128-aligned tk that fits the VMEM budget.
    if _tile_bytes(tm, tn, D) <= _VMEM_TILE_BUDGET:
        tk, Dp = D, D
    else:
        tk = 2048
        while tk > 128 and _tile_bytes(tm, tn, tk) > _VMEM_TILE_BUDGET:
            tk //= 2
        Dp = _round_up(D, tk)

    # --- v7x megacore: make sure a "parallel" axis has >= 2 blocks when possible.
    if (Cp // tn == 1) and (Bp // tm == 1) and Bp >= 16 and Bp % 16 == 0:
        tm = Bp // 2

    return LinearTileConfig(tm=tm, tn=tn, tk=tk, Bp=Bp, Dp=Dp, Cp=Cp)


def prepare_fc1_params(weight, bias, cfg: LinearTileConfig):
    """One-time parameter prep: transpose W to (D, C) and zero-pad to (Dp, Cp).

    In a real model this is hoisted out of the per-call path (static params).
    """
    C, D = weight.shape
    wt = weight.T                                   # (D, C), no in-kernel transpose
    if cfg.Dp != D or cfg.Cp != C:
        wt = jnp.pad(wt, ((0, cfg.Dp - D), (0, cfg.Cp - C)))
    b = bias if cfg.Cp == C else jnp.pad(bias, (0, cfg.Cp - C))
    return wt, b.reshape(1, cfg.Cp)


def _linear_kernel(x_ref, w_ref, b_ref, o_ref):
    # x_ref: (tm, tk), w_ref: (tk, tn) [pre-transposed], b_ref: (1, tn),
    # o_ref: (tm, tn) f32 — resident across the K grid axis (index_map ignores k).
    @pl.when(pl.program_id(2) == 0)
    def _():
        # Seed the resident output tile with the bias; K partials accumulate on top.
        o_ref[...] = jnp.broadcast_to(b_ref[...], o_ref.shape).astype(o_ref.dtype)

    o_ref[...] += jnp.dot(x_ref[...], w_ref[...], preferred_element_type=jnp.float32)


def linear_forward(x, wt_p, b_p, cfg: LinearTileConfig):
    """x: (B, D) f32; wt_p: (Dp, Cp) f32; b_p: (1, Cp) f32 -> (Bp, Cp) f32."""
    B, D = x.shape
    x_p = x
    if cfg.Bp != B or cfg.Dp != D:
        x_p = jnp.pad(x, ((0, cfg.Bp - B), (0, cfg.Dp - D)))

    grid = (cfg.Bp // cfg.tm, cfg.Cp // cfg.tn, cfg.Dp // cfg.tk)

    return pl.pallas_call(
        _linear_kernel,
        out_shape=jax.ShapeDtypeStruct((cfg.Bp, cfg.Cp), jnp.float32),
        grid_spec=pltpu.PrefetchScalarGridSpec(
            num_scalar_prefetch=0,
            grid=grid,
            in_specs=[
                pl.BlockSpec((cfg.tm, cfg.tk), lambda i, j, k: (i, k)),   # x tile
                pl.BlockSpec((cfg.tk, cfg.tn), lambda i, j, k: (k, j)),   # W.T tile
                pl.BlockSpec((1, cfg.tn), lambda i, j, k: (0, j)),        # bias (resident per N)
            ],
            out_specs=pl.BlockSpec((cfg.tm, cfg.tn), lambda i, j, k: (i, j)),
        ),
        compiler_params=pltpu.CompilerParams(
            # M/N independent -> megacore-shardable; K is the (innermost) reduction.
            dimension_semantics=("parallel", "parallel", "arbitrary"),
            vmem_limit_bytes=_VMEM_LIMIT_BYTES,
        ),
    )(x_p, wt_p, b_p)


def one_layer_mlp(x, weight, bias):
    """Forward pass of OneLayerMLP: fc1(x) = x @ weight.T + bias."""
    B, D = x.shape
    C = weight.shape[0]
    cfg = choose_tiles(B, D, C)
    wt_p, b_p = prepare_fc1_params(weight, bias, cfg)   # hoist once in real use
    out = linear_forward(x, wt_p, b_p, cfg)
    if out.shape != (B, C):
        out = out[:B, :C]
    return out


if __name__ == "__main__":
    # Small shapes consistent with the module: input_dim=32, num_classes=16, batch=8.
    batch, input_dim, num_classes = 8, 32, 16

    key = jax.random.PRNGKey(0)
    kx, kw, kb = jax.random.split(key, 3)

    x = jax.random.normal(kx, (batch, input_dim), dtype=jnp.float32)

    # Deterministic parameter init (mimics nn.Linear's uniform(-1/sqrt(D), 1/sqrt(D))).
    bound = 1.0 / (input_dim ** 0.5)
    weight = jax.random.uniform(
        kw, (num_classes, input_dim), minval=-bound, maxval=bound, dtype=jnp.float32
    )
    bias = jax.random.uniform(
        kb, (num_classes,), minval=-bound, maxval=bound, dtype=jnp.float32
    )

    out = one_layer_mlp(x, weight, bias)
    out = jax.block_until_ready(out)

    ref = (
        np.asarray(x, dtype=np.float32) @ np.asarray(weight, dtype=np.float32).T
        + np.asarray(bias, dtype=np.float32)
    )
    assert out.shape == (batch, num_classes)
    np.testing.assert_allclose(np.asarray(out), ref, atol=1e-4, rtol=1e-4)

    # Second check: un-aligned shapes exercise B/C padding + slicing and the
    # full-K (tk = D, D not a multiple of 128) path.
    b2, d2, c2 = 12, 200, 300
    k2x, k2w, k2b = jax.random.split(jax.random.PRNGKey(1), 3)
    x2 = jax.random.normal(k2x, (b2, d2), dtype=jnp.float32)
    bound2 = 1.0 / (d2 ** 0.5)
    w2 = jax.random.uniform(k2w, (c2, d2), minval=-bound2, maxval=bound2, dtype=jnp.float32)
    bz2 = jax.random.uniform(k2b, (c2,), minval=-bound2, maxval=bound2, dtype=jnp.float32)

    out2 = jax.block_until_ready(one_layer_mlp(x2, w2, bz2))
    ref2 = (
        np.asarray(x2, dtype=np.float32) @ np.asarray(w2, dtype=np.float32).T
        + np.asarray(bz2, dtype=np.float32)
    )
    assert out2.shape == (b2, c2)
    np.testing.assert_allclose(np.asarray(out2), ref2, atol=1e-4, rtol=1e-4)

    print("KERNEL_OK")
</pallas_src>

<mosaic_0001>
module attributes {stable_mosaic.version = 11 : i64} {
  func.func @_linear_kernel(%arg0: i32, %arg1: i32, %arg2: i32, %arg3: memref<8x32xf32, #tpu.memory_space<vmem>>, %arg4: memref<32x128xf32, #tpu.memory_space<vmem>>, %arg5: memref<1x128xf32, #tpu.memory_space<vmem>>, %arg6: memref<8x128xf32, #tpu.memory_space<vmem>>) attributes {dimension_semantics = [#tpu.dimension_semantics<parallel>, #tpu.dimension_semantics<parallel>, #tpu.dimension_semantics<arbitrary>], iteration_bounds = array<i64: 1, 1, 1>, scalar_prefetch = 0 : i64, scratch_operands = 0 : i64, tpu.core_type = #tpu.core_type<tc>, window_params = [{transform_indices = @transform_0, window_bounds = array<i64: 8, 32>}, {transform_indices = @transform_1, window_bounds = array<i64: 32, 128>}, {transform_indices = @transform_2, window_bounds = array<i64: 1, 128>}, {transform_indices = @transform_3, window_bounds = array<i64: 8, 128>}]} {
    %c0_i32 = arith.constant 0 : i32
    %0 = arith.cmpi eq, %arg2, %c0_i32 : i32
    %1 = arith.extui %0 : i1 to i32
    %c0_i32_0 = arith.constant 0 : i32
    %2 = arith.cmpi ne, %1, %c0_i32_0 : i32
    scf.if %2 {
      %c0_8 = arith.constant 0 : index
      %c0_9 = arith.constant 0 : index
      %9 = vector.load %arg5[%c0_8, %c0_9] : memref<1x128xf32, #tpu.memory_space<vmem>>, vector<1x128xf32>
      %10 = vector.shape_cast %9 : vector<1x128xf32> to vector<1x128xf32>
      %11 = vector.broadcast %10 : vector<1x128xf32> to vector<8x128xf32>
      %c0_10 = arith.constant 0 : index
      %c0_11 = arith.constant 0 : index
      %12 = vector.load %arg6[%c0_10, %c0_11] : memref<8x128xf32, #tpu.memory_space<vmem>>, vector<8x128xf32>
      tpu.vector_store %arg6[%c0_10, %c0_11], %11 {strides = array<i32>} : memref<8x128xf32, #tpu.memory_space<vmem>>, vector<8x128xf32>,
    } else {
    }
    %c0 = arith.constant 0 : index
    %c0_1 = arith.constant 0 : index
    %3 = vector.load %arg6[%c0, %c0_1] : memref<8x128xf32, #tpu.memory_space<vmem>>, vector<8x128xf32>
    %c0_2 = arith.constant 0 : index
    %c0_3 = arith.constant 0 : index
    %4 = vector.load %arg3[%c0_2, %c0_3] : memref<8x32xf32, #tpu.memory_space<vmem>>, vector<8x32xf32>
    %c0_4 = arith.constant 0 : index
    %c0_5 = arith.constant 0 : index
    %5 = vector.load %arg4[%c0_4, %c0_5] : memref<32x128xf32, #tpu.memory_space<vmem>>, vector<32x128xf32>
    %cst = arith.constant dense<0.000000e+00> : vector<8x128xf32>
    %6 = tpu.matmul %4, %5, %cst {dimension_numbers = #tpu.dot_dimension_numbers<[1], [0], [0], [1], [0, 0, 1, 1], [], []>} : vector<8x32xf32>, vector<32x128xf32>, vector<8x128xf32> -> vector<8x128xf32>
    %7 = arith.addf %3, %6 : vector<8x128xf32>
    %c0_6 = arith.constant 0 : index
    %c0_7 = arith.constant 0 : index
    %8 = vector.load %arg6[%c0_6, %c0_7] : memref<8x128xf32, #tpu.memory_space<vmem>>, vector<8x128xf32>
    tpu.vector_store %arg6[%c0_6, %c0_7], %7 {strides = array<i32>} : memref<8x128xf32, #tpu.memory_space<vmem>>, vector<8x128xf32>,
    return
  }
  func.func @transform_0(%arg0: i32, %arg1: i32, %arg2: i32) -> (i32, i32) {
    %c0_i32 = arith.constant 0 : i32
    return %arg0, %arg2 : i32, i32
  }
  func.func @transform_1(%arg0: i32, %arg1: i32, %arg2: i32) -> (i32, i32) {
    %c0_i32 = arith.constant 0 : i32
    return %arg2, %arg1 : i32, i32
  }
  func.func @transform_2(%arg0: i32, %arg1: i32, %arg2: i32) -> (i32, i32) {
    %c0_i32 = arith.constant 0 : i32
    %c0_i32_0 = arith.constant 0 : i32
    return %c0_i32, %arg1 : i32, i32
  }
  func.func @transform_3(%arg0: i32, %arg1: i32, %arg2: i32) -> (i32, i32) {
    %c0_i32 = arith.constant 0 : i32
    return %arg0, %arg1 : i32, i32
  }
}

</mosaic_0001>

<llo_original>
// kernel: tpu_custom_call.1
$region0: #{tpu_custom_call.1}
  #allocation0 [shape = 'u32[]', space=smem, size = 0x4, offset = 0x4, fixed_abs, tag = 'smem constant byte address 0x4 - core index']
  #allocation1 [shape = 'u32[144,128]{1,0:T(1,128)}', space=vmem, size = 0x12000, scoped, tag = 'internal scratch']
  %s0 = inlined_call_operand.hbm [shape: f32[8,32], index: 0, kind: input, shape index: {}]
  %s1 = inlined_call_operand.hbm [shape: f32[32,128], index: 1, kind: input, shape index: {}]
  %s2 = inlined_call_operand.vmem [shape: f32[1,128], index: 2, kind: input, shape index: {}]
  %s3 = inlined_call_operand.hbm [shape: f32[8,128], index: 3, kind: output, shape index: {}]
  %s4 = sld [smem:[#allocation0]]
  $region34: #{tpu_custom_call.1} parent=0
    _
  %s6 = ssub.s32 1, %s4
  %s7 = scalar_select 0, %s6, %s4
  $region1: #{tpu_custom_call.1} parent=0
    #allocation2 [shape = 'u8[4096]{0}', space=vmem, size = 0x1000, scoped, tag = 'input window, operand 0, single buffered']
    #allocation3 [shape = 's32[1]{0}', space=sflag, size = 0x4, scoped, tag = 'scoped memory for tpu_custom_call.1']
    #allocation4 [shape = 's32[1]{0}', space=sflag, size = 0x4, scoped, tag = 'scoped memory for tpu_custom_call.1']
    #allocation5 [shape = 'u8[16384]{0}', space=vmem, size = 0x4000, scoped, tag = 'input window, operand 1, single buffered']
    #allocation6 [shape = 's32[1]{0}', space=sflag, size = 0x4, scoped, tag = 'scoped memory for tpu_custom_call.1']
    #allocation7 [shape = 'u8[4096]{0}', space=vmem, size = 0x1000, scoped, tag = 'output window, operand 0, single buffered']
    %8 = vsyncpa [#allocation3], 0
    %9 = vsyncpa [#allocation6], 0
    %10 = vsyncpa [#allocation4], 0
    // Predicated region
    $region2: #{tpu_custom_call.1} parent=1 // pred_check
      _
    $region3: #{tpu_custom_call.1} parent=1 // pred_check_branch
      %12 = sbr.rel (0) target = $region5
    $region4: #{tpu_custom_call.1} parent=1 // pred_region
      %s14 = ssub.s32 128, 128
      %15 = vsyncadd [#allocation3], %s14
      %s17 = sshll.u32 [#allocation2], 4
      %s18 = int_to_ptr.vmem [resolvable:$true] %s17
      %20 = dma.hbm_to_vmem [thread:$0]  %s0, 128, %s18, [#allocation3]
    $region5: #{tpu_custom_call.1} parent=1 // pred_fallthru
      _
    // Predicated region
    $region6: #{tpu_custom_call.1} parent=1 // pred_check
      _
    $region7: #{tpu_custom_call.1} parent=1 // pred_check_branch
      %22 = sbr.rel (0) target = $region9
    $region8: #{tpu_custom_call.1} parent=1 // pred_region
      %s24 = ssub.s32 512, 512
      %25 = vsyncadd [#allocation6], %s24
      %s26 = sshll.u32 [#allocation5], 4
      %s27 = int_to_ptr.vmem [resolvable:$true] %s26
      %32 = dma.hbm_to_vmem [thread:$0]  %s1, 512, %s27, [#allocation6], 128, 128, 8
    $region9: #{tpu_custom_call.1} parent=1 // pred_fallthru
      _
    // Predicated region
    $region10: #{tpu_custom_call.1} parent=1 // pred_check
      _
    $region11: #{tpu_custom_call.1} parent=1 // pred_check_branch
      %34 = sbr.rel (0) target = $region13
    $region12: #{tpu_custom_call.1} parent=1 // pred_region
      _
    $region13: #{tpu_custom_call.1} parent=1 // pred_fallthru
      _
    // Predicated region
    $region14: #{tpu_custom_call.1} parent=1 // pred_check
      _
    $region15: #{tpu_custom_call.1} parent=1 // pred_check_branch
      %36 = sbr.rel (0) target = $region17
    $region16: #{tpu_custom_call.1} parent=1 // pred_region
      %37 = dma.done [#allocation3], 128
    $region17: #{tpu_custom_call.1} parent=1 // pred_fallthru
      _
    // Predicated region
    $region18: #{tpu_custom_call.1} parent=1 // pred_check
      _
    $region19: #{tpu_custom_call.1} parent=1 // pred_check_branch
      %39 = sbr.rel (0) target = $region21
    $region20: #{tpu_custom_call.1} parent=1 // pred_region
      %40 = dma.done [#allocation6], 512
    $region21: #{tpu_custom_call.1} parent=1 // pred_fallthru
      _
    %p41 = scmp.eq.s32.totalorder 0, 0
    // Predicated region
    $region22: #{tpu_custom_call.1} parent=1 // pred_check
      %p42 = pneg %p41
    $region23: #{tpu_custom_call.1} parent=1 // pred_check_branch
      %44 = sbr.rel (%p42) target = $region25
    $region24: #{tpu_custom_call.1} parent=1 // pred_region
      %v45 = vld [vmem:[%s2] sm:$0x1]
      %v47 = vlaneseq
      %v48 = vshrl.u32 %v47, 7
      %v49 = vsub.s32 0, %v48
      %v50 = vrot.slane %v45, %v49
      %52 = vst [vmem:[#allocation7] sm:$0xff] %v50
    $region25: #{tpu_custom_call.1} parent=1 // pred_fallthru
      _
    %v53 = vld [vmem:[#allocation7] sm:$0xff]
    %v54 = vld [vmem:[#allocation2] sm:$0xff]
    %v55 = vld [vmem:[#allocation5] sm:$0xff]
    %v56 = vld [vmem:[#allocation5 + $0x8] sm:$0xff]
    %v57 = vld [vmem:[#allocation5 + $0x10] sm:$0xff]
    %v58 = vld [vmem:[#allocation5 + $0x18] sm:$0xff]
    %vm59 = vcmask 261120
    %v61 = vsel %vm59, %v54, 0
    %63 = vmatprep.subr.mxu0 0.0
    %64 = vmatpush1.msra.mxu0 0.0
    %65 = vmatprep.subr.mxu0 0.0
    %66 = vmatpush1.msra.mxu0 0.0
    %67 = vmatprep.subr.mxu0 0.0
    %68 = vmatpush1.msra.mxu0 0.0
    %69 = vmatprep.subr.mxu0 0.0
    %70 = vmatpush1.msra.mxu0 0.0
    %71 = vmatprep.subr.mxu0 0.0
    %72 = vmatpush1.msra.mxu0 0.0
    %73 = vmatprep.subr.mxu0 0.0
    %74 = vmatpush1.msra.mxu0 0.0
    %75 = vmatprep.subr.mxu0 0.0
    %76 = vmatpush1.msra.mxu0 0.0
    %77 = vmatprep.subr.mxu0 0.0
    %78 = vmatpush1.msra.mxu0 0.0
    %79 = vmatprep.subr.mxu0 0.0
    %80 = vmatpush1.msra.mxu0 0.0
    %81 = vmatprep.subr.mxu0 0.0
    %82 = vmatpush1.msra.mxu0 0.0
    %83 = vmatprep.subr.mxu0 0.0
    %84 = vmatpush1.msra.mxu0 0.0
    %85 = vmatprep.subr.mxu0 0.0
    %86 = vmatpush1.msra.mxu0 0.0
    %87 = vmatprep.subr.mxu0 0.0
    %88 = vmatpush1.msra.mxu0 %v58
    %89 = vmatprep.subr.mxu0 0.0
    %90 = vmatpush1.msra.mxu0 %v57
    %91 = vmatprep.subr.mxu0 0.0
    %92 = vmatpush1.msra.mxu0 %v56
    %93 = vmatprep.subr.mxu0 0.0
    %94 = vmatpush1.msra.mxu0 %v55
    %95 = vmatprep.subr.mxu0 0.0
    %96 = vmatpush2.msra.mxu0 0.0
    %97 = vmatprep.subr.mxu0 0.0
    %98 = vmatpush2.msra.mxu0 0.0
    %99 = vmatprep.subr.mxu0 0.0
    %100 = vmatpush2.msra.mxu0 0.0
    %101 = vmatprep.subr.mxu0 0.0
    %102 = vmatpush2.msra.mxu0 0.0
    %103 = vmatprep.subr.mxu0 0.0
    %104 = vmatpush2.msra.mxu0 0.0
    %105 = vmatprep.subr.mxu0 0.0
    %106 = vmatpush2.msra.mxu0 0.0
    %107 = vmatprep.subr.mxu0 0.0
    %108 = vmatpush2.msra.mxu0 0.0
    %109 = vmatprep.subr.mxu0 0.0
    %110 = vmatpush2.msra.mxu0 0.0
    %111 = vmatprep.subr.mxu0 0.0
    %112 = vmatpush2.msra.mxu0 0.0
    %113 = vmatprep.subr.mxu0 0.0
    %114 = vmatpush2.msra.mxu0 0.0
    %115 = vmatprep.subr.mxu0 0.0
    %116 = vmatpush2.msra.mxu0 0.0
    %117 = vmatprep.subr.mxu0 0.0
    %118 = vmatpush2.msra.mxu0 0.0
    %119 = vmatprep.subr.mxu0 0.0
    %120 = vmatpush2.msra.mxu0 0.0
    %121 = vmatprep.subr.mxu0 0.0
    %122 = vmatpush2.msra.mxu0 0.0
    %123 = vmatprep.subr.mxu0 0.0
    %124 = vmatpush2.msra.mxu0 0.0
    %125 = vmatprep.subr.mxu0 0.0
    %126 = vmatpush2.msra.mxu0 0.0
    %127 = vmatprep.mubr.f32.mxu0 0.0
    %128 = vmatmul.mubr.f32.gmra.mxu0 %v61
    %v129 = vpop.f32.mrf.mxu0
    %v130 = vadd.f32 0.0, %v129
    %v131 = vpop.f32.mrf.mxu0
    %132 = vdwg.mxu0
    %v133 = vadd.f32 %v53, %v130
    %134 = vst [vmem:[#allocation7] sm:$0xff] %v133
    // Predicated region
    $region26: #{tpu_custom_call.1} parent=1 // pred_check
      _
    $region27: #{tpu_custom_call.1} parent=1 // pred_check_branch
      %136 = sbr.rel (0) target = $region29
    $region28: #{tpu_custom_call.1} parent=1 // pred_region
      %s138 = ssub.s32 128, 128
      %139 = vsyncadd [#allocation4], %s138
      %s141 = sshll.u32 [#allocation7], 4
      %s142 = int_to_ptr.vmem [resolvable:$true] %s141
      %144 = dma.vmem_to_hbm [thread:$0]  %s142, 128, %s3, [#allocation4]
    $region29: #{tpu_custom_call.1} parent=1 // pred_fallthru
      _
    // Predicated region
    $region30: #{tpu_custom_call.1} parent=1 // pred_check
      _
    $region31: #{tpu_custom_call.1} parent=1 // pred_check_branch
      %146 = sbr.rel (0) target = $region33
    $region32: #{tpu_custom_call.1} parent=1 // pred_region
      %147 = dma.done [#allocation4], 128
    $region33: #{tpu_custom_call.1} parent=1 // pred_fallthru
      _
    %148 = vsyncpa [#allocation3], 1
    %149 = vsyncpa [#allocation6], 1
    %150 = vsyncpa [#allocation4], 1

</llo_original>
